<compile_context>
chip_gen: v7x
topology: tpu7x:2x2x1
jax: 0.10.0
libtpu: 0.0.40
codegen_flags: <defaults>
</compile_context>

<pallas_src>
import math

import jax
import jax.numpy as jnp
import numpy as np
from jax.experimental import pallas as pl
from jax.experimental.pallas import tpu as pltpu

HIDDEN = 16
LANES = 128
SUBLANES = 8


# ----------------------------------------------------------------------------- kernel
def rootnet_kernel(x_ref, w1_ref, b1_ref, w2_ref, b2_ref, o_ref):
    # Layer 1: x @ W1 + b1, ReLU.  All operands VMEM-resident; f32 accumulation.
    h = jnp.dot(x_ref[...], w1_ref[...], preferred_element_type=jnp.float32)
    h = jnp.maximum(h + b1_ref[...], 0.0)
    # Layer 2: h @ W2 + b2.
    y = jnp.dot(h, w2_ref[...], preferred_element_type=jnp.float32) + b2_ref[...]
    o_ref[...] = y.astype(o_ref.dtype)


# ----------------------------------------------------------------------------- helpers
def _round_up(v, m):
    return -(-v // m) * m


def _physical_vmem_bytes():
    """Per-core VMEM capacity; conservative fallback (v7x = 64 MiB) if unavailable."""
    try:
        info = pltpu.get_tpu_info()
        v = getattr(info, "vmem_capacity_bytes", None)
        if v:
            return int(v)
    except Exception:
        pass
    return 64 << 20


def _lane_fold_factor(n, m, hidden, itemsize, max_fold=64, max_weight_bytes=16 << 20):
    """Smallest batch-fold F that makes the folded x width (F*n) and the folded output
    width (F*m) multiples of 128 lanes, subject to the block-diagonal weights staying
    small.  Falls back to output-only / input-only / no fold."""
    f_x = LANES // math.gcd(n, LANES)     # makes x lane-dense
    f_o = LANES // math.gcd(m, LANES)     # makes the output lane-dense (biggest lever)
    f_both = f_x * f_o // math.gcd(f_x, f_o)
    for f in (f_both, f_o, f_x, 1):
        weight_bytes = f * f * (n * hidden + hidden * m) * itemsize
        if f <= max_fold and weight_bytes <= max_weight_bytes:
            return f
    return 1


def _block_diag(w, f):
    """(in, out) -> (f*in, f*out) block-diagonal replication of w."""
    n_in, n_out = w.shape
    eye = jnp.eye(f, dtype=w.dtype)
    return jnp.einsum("ab,io->aibo", eye, w).reshape(f * n_in, f * n_out)


def _choose_batch_tile(b_folded, x_width, out_width, itemsize, budget_bytes,
                       max_tile=32768):
    """Largest multiple-of-8 folded-batch tile whose double-buffered, LANE-PADDED
    x + out tiles fit the per-generation budget."""
    x_pad = _round_up(x_width, LANES)
    o_pad = _round_up(out_width, LANES)
    per_row = 2 * itemsize * (x_pad + o_pad)          # 2 pipeline buffers each
    tb = max(SUBLANES, (budget_bytes // max(per_row, 1)) // SUBLANES * SUBLANES)
    tb = min(tb, max_tile)
    tb = min(tb, _round_up(b_folded, SUBLANES))       # never bigger than padded batch
    return tb


# ----------------------------------------------------------------------------- wrapper
def rootnet_forward(x, w1, b1, w2, b2):
    """x: [B, n]; w1: [n, H]; b1: [1, H]; w2: [H, M]; b2: [1, M] -> [B, M]"""
    B, n = x.shape
    H = w1.shape[1]
    M = w2.shape[1]
    dtype = x.dtype
    itemsize = jnp.dtype(dtype).itemsize

    # --- lane-dense block-diagonal batch fold ------------------------------------
    F = _lane_fold_factor(n, M, H, itemsize)
    if F > 1:
        w1f = _block_diag(w1, F)
        w2f = _block_diag(w2, F)
        b1f = jnp.tile(b1, (1, F))
        b2f = jnp.tile(b2, (1, F))
    else:
        w1f, b1f, w2f, b2f = w1, b1, w2, b2
    n_f, H_f, M_f = F * n, F * H, F * M

    # --- per-generation VMEM budget and batch tile --------------------------------
    phys_vmem = _physical_vmem_bytes()
    budget = int(phys_vmem * 0.6)                     # headroom for weights + scratch

    b_folded = -(-B // F)                             # ceil(B / F)
    TB = _choose_batch_tile(b_folded, n_f, M_f, itemsize, budget)

    grid_n = -(-b_folded // TB)
    # Megacore (v7x): prefer an even grid when there is more than one tile.
    if grid_n > 1 and grid_n % 2 == 1:
        grid_n += 1
        TB = _round_up(-(-b_folded // grid_n), SUBLANES)
        grid_n = -(-b_folded // TB)

    B_f_pad = grid_n * TB
    B_pad = B_f_pad * F
    if B_pad != B:
        x = jnp.pad(x, ((0, B_pad - B), (0, 0)))      # zero rows, sliced off later
    x_f = x.reshape(B_f_pad, n_f)                     # free row-major reshape

    # --- explicit scoped-VMEM limit ------------------------------------------------
    tile_bytes = 2 * TB * (_round_up(n_f, LANES) + _round_up(M_f, LANES)) * itemsize
    param_bytes = itemsize * (w1f.size + w2f.size + b1f.size + b2f.size)
    vmem_limit = int(min(phys_vmem * 0.9,
                         max(tile_bytes + 2 * param_bytes + (8 << 20), 32 << 20)))

    cost = pl.CostEstimate(
        flops=2 * B_pad * (n * H + H * M),
        transcendentals=0,
        bytes_accessed=itemsize * (B_pad * n + B_pad * M
                                   + w1f.size + w2f.size + b1f.size + b2f.size),
    )

    out_f = pl.pallas_call(
        rootnet_kernel,
        out_shape=jax.ShapeDtypeStruct((B_f_pad, M_f), dtype),
        grid_spec=pl.GridSpec(
            grid=(grid_n,),
            in_specs=[
                pl.BlockSpec((TB, n_f), lambda i: (i, 0)),    # lane-dense activations
                pl.BlockSpec((n_f, H_f), lambda i: (0, 0)),   # weights: VMEM-resident
                pl.BlockSpec((1, H_f), lambda i: (0, 0)),
                pl.BlockSpec((H_f, M_f), lambda i: (0, 0)),
                pl.BlockSpec((1, M_f), lambda i: (0, 0)),
            ],
            out_specs=pl.BlockSpec((TB, M_f), lambda i: (i, 0)),  # lane-dense output
        ),
        compiler_params=pltpu.CompilerParams(
            dimension_semantics=("parallel",),        # independent batch tiles
            vmem_limit_bytes=vmem_limit,
        ),
        cost_estimate=cost,
    )(x_f, w1f, b1f, w2f, b2f)

    out = out_f.reshape(B_pad, M)
    return out[:B] if B_pad != B else out


# ----------------------------------------------------------------------------- params / reference
def init_rootnet_params(key, n, num_outputs, dtype=jnp.float32):
    """Mimics PyTorch nn.Linear default init: U(-1/sqrt(fan_in), 1/sqrt(fan_in)).
    Weights stored pre-transposed ([in, out]) so the kernel computes x @ w."""
    k1, k2, k3, k4 = jax.random.split(key, 4)
    bound1 = 1.0 / jnp.sqrt(jnp.float32(n))
    bound2 = 1.0 / jnp.sqrt(jnp.float32(HIDDEN))
    w1 = jax.random.uniform(k1, (n, HIDDEN), dtype, -bound1, bound1)
    b1 = jax.random.uniform(k2, (1, HIDDEN), dtype, -bound1, bound1)
    w2 = jax.random.uniform(k3, (HIDDEN, num_outputs), dtype, -bound2, bound2)
    b2 = jax.random.uniform(k4, (1, num_outputs), dtype, -bound2, bound2)
    return w1, b1, w2, b2


def rootnet_reference(x, w1, b1, w2, b2):
    h = jnp.maximum(x @ w1 + b1, 0.0)
    return h @ w2 + b2


if __name__ == "__main__":
    # Small shapes consistent with RootNet(n=32, num_outputs=8), batch=8.
    B, n, num_outputs = 8, 32, 8

    key = jax.random.PRNGKey(0)
    kx, kp = jax.random.split(key)
    x = jax.random.normal(kx, (B, n), jnp.float32)
    w1, b1, w2, b2 = init_rootnet_params(kp, n, num_outputs)

    out = jax.block_until_ready(rootnet_forward(x, w1, b1, w2, b2))
    ref = rootnet_reference(x, w1, b1, w2, b2)
    assert out.shape == (B, num_outputs)
    assert jnp.allclose(out, ref, atol=1e-3, rtol=1e-3), \
        f"max abs err {float(jnp.max(jnp.abs(out - ref)))}"

    # Exercise a non-multiple, larger batch to validate padding + fold + tiling path.
    B2 = 1000
    x2 = jax.random.normal(kx, (B2, n), jnp.float32)
    out2 = jax.block_until_ready(rootnet_forward(x2, w1, b1, w2, b2))
    ref2 = rootnet_reference(x2, w1, b1, w2, b2)
    assert out2.shape == (B2, num_outputs)
    assert jnp.allclose(out2, ref2, atol=1e-3, rtol=1e-3), \
        f"max abs err {float(jnp.max(jnp.abs(out2 - ref2)))}"

    print("KERNEL_OK")
</pallas_src>

<mosaic_0001>
module attributes {stable_mosaic.version = 11 : i64} {
  func.func @rootnet_kernel(%arg0: i32, %arg1: memref<8x512xf32, #tpu.memory_space<vmem>>, %arg2: memref<512x256xf32, #tpu.memory_space<vmem>>, %arg3: memref<1x256xf32, #tpu.memory_space<vmem>>, %arg4: memref<256x128xf32, #tpu.memory_space<vmem>>, %arg5: memref<1x128xf32, #tpu.memory_space<vmem>>, %arg6: memref<8x128xf32, #tpu.memory_space<vmem>>) attributes {dimension_semantics = [#tpu.dimension_semantics<parallel>], iteration_bounds = array<i64: 1>, scalar_prefetch = 0 : i64, scratch_operands = 0 : i64, tpu.core_type = #tpu.core_type<tc>, window_params = [{transform_indices = @transform_0, window_bounds = array<i64: 8, 512>}, {pipeline_mode = #tpu.pipeline_mode<synchronous>, transform_indices = @transform_1, window_bounds = array<i64: 512, 256>}, {pipeline_mode = #tpu.pipeline_mode<synchronous>, transform_indices = @transform_2, window_bounds = array<i64: 1, 256>}, {pipeline_mode = #tpu.pipeline_mode<synchronous>, transform_indices = @transform_3, window_bounds = array<i64: 256, 128>}, {pipeline_mode = #tpu.pipeline_mode<synchronous>, transform_indices = @transform_4, window_bounds = array<i64: 1, 128>}, {transform_indices = @transform_5, window_bounds = array<i64: 8, 128>}]} {
    %c0 = arith.constant 0 : index
    %c0_0 = arith.constant 0 : index
    %0 = vector.load %arg1[%c0, %c0_0] : memref<8x512xf32, #tpu.memory_space<vmem>>, vector<8x512xf32>
    %c0_1 = arith.constant 0 : index
    %c0_2 = arith.constant 0 : index
    %1 = vector.load %arg2[%c0_1, %c0_2] : memref<512x256xf32, #tpu.memory_space<vmem>>, vector<512x256xf32>
    %cst = arith.constant dense<0.000000e+00> : vector<8x256xf32>
    %2 = tpu.matmul %0, %1, %cst {dimension_numbers = #tpu.dot_dimension_numbers<[1], [0], [0], [1], [0, 0, 1, 1], [], []>} : vector<8x512xf32>, vector<512x256xf32>, vector<8x256xf32> -> vector<8x256xf32>
    %c0_3 = arith.constant 0 : index
    %c0_4 = arith.constant 0 : index
    %3 = vector.load %arg3[%c0_3, %c0_4] : memref<1x256xf32, #tpu.memory_space<vmem>>, vector<1x256xf32>
    %4 = vector.broadcast %3 : vector<1x256xf32> to vector<8x256xf32>
    %5 = arith.addf %2, %4 : vector<8x256xf32>
    %cst_5 = arith.constant 0.000000e+00 : f32
    %6 = vector.broadcast %cst_5 : f32 to vector<8x256xf32>
    %7 = arith.maximumf %5, %6 : vector<8x256xf32>
    %c0_6 = arith.constant 0 : index
    %c0_7 = arith.constant 0 : index
    %8 = vector.load %arg4[%c0_6, %c0_7] : memref<256x128xf32, #tpu.memory_space<vmem>>, vector<256x128xf32>
    %cst_8 = arith.constant dense<0.000000e+00> : vector<8x128xf32>
    %9 = tpu.matmul %7, %8, %cst_8 {dimension_numbers = #tpu.dot_dimension_numbers<[1], [0], [0], [1], [0, 0, 1, 1], [], []>} : vector<8x256xf32>, vector<256x128xf32>, vector<8x128xf32> -> vector<8x128xf32>
    %c0_9 = arith.constant 0 : index
    %c0_10 = arith.constant 0 : index
    %10 = vector.load %arg5[%c0_9, %c0_10] : memref<1x128xf32, #tpu.memory_space<vmem>>, vector<1x128xf32>
    %11 = vector.broadcast %10 : vector<1x128xf32> to vector<8x128xf32>
    %12 = arith.addf %9, %11 : vector<8x128xf32>
    %c0_11 = arith.constant 0 : index
    %c0_12 = arith.constant 0 : index
    %13 = vector.load %arg6[%c0_11, %c0_12] : memref<8x128xf32, #tpu.memory_space<vmem>>, vector<8x128xf32>
    tpu.vector_store %arg6[%c0_11, %c0_12], %12 {strides = array<i32>} : memref<8x128xf32, #tpu.memory_space<vmem>>, vector<8x128xf32>,
    return
  }
  func.func @transform_0(%arg0: i32) -> (i32, i32) {
    %c0_i32 = arith.constant 0 : i32
    %c0_i32_0 = arith.constant 0 : i32
    return %arg0, %c0_i32 : i32, i32
  }
  func.func @transform_1(%arg0: i32) -> (i32, i32) {
    %c0_i32 = arith.constant 0 : i32
    %c0_i32_0 = arith.constant 0 : i32
    %c0_i32_1 = arith.constant 0 : i32
    return %c0_i32, %c0_i32_0 : i32, i32
  }
  func.func @transform_2(%arg0: i32) -> (i32, i32) {
    %c0_i32 = arith.constant 0 : i32
    %c0_i32_0 = arith.constant 0 : i32
    %c0_i32_1 = arith.constant 0 : i32
    return %c0_i32, %c0_i32_0 : i32, i32
  }
  func.func @transform_3(%arg0: i32) -> (i32, i32) {
    %c0_i32 = arith.constant 0 : i32
    %c0_i32_0 = arith.constant 0 : i32
    %c0_i32_1 = arith.constant 0 : i32
    return %c0_i32, %c0_i32_0 : i32, i32
  }
  func.func @transform_4(%arg0: i32) -> (i32, i32) {
    %c0_i32 = arith.constant 0 : i32
    %c0_i32_0 = arith.constant 0 : i32
    %c0_i32_1 = arith.constant 0 : i32
    return %c0_i32, %c0_i32_0 : i32, i32
  }
  func.func @transform_5(%arg0: i32) -> (i32, i32) {
    %c0_i32 = arith.constant 0 : i32
    %c0_i32_0 = arith.constant 0 : i32
    return %arg0, %c0_i32 : i32, i32
  }
}

</mosaic_0001>

<llo_original>
// kernel: tpu_custom_call.1
$region0: #{tpu_custom_call.1}
  #allocation0 [shape = 'u32[]', space=smem, size = 0x4, offset = 0x4, fixed_abs, tag = 'smem constant byte address 0x4 - core index']
  #allocation1 [shape = 'u32[144,128]{1,0:T(1,128)}', space=vmem, size = 0x12000, scoped, tag = 'internal scratch']
  %s0 = inlined_call_operand.hbm [shape: f32[8,512], index: 0, kind: input, shape index: {}]
  %s1 = inlined_call_operand.hbm [shape: f32[512,256], index: 1, kind: input, shape index: {}]
  %s2 = inlined_call_operand.vmem [shape: f32[1,256], index: 2, kind: input, shape index: {}]
  %s3 = inlined_call_operand.hbm [shape: f32[256,128], index: 3, kind: input, shape index: {}]
  %s4 = inlined_call_operand.vmem [shape: f32[1,128], index: 4, kind: input, shape index: {}]
  %s5 = inlined_call_operand.hbm [shape: f32[8,128], index: 5, kind: output, shape index: {}]
  %s6 = sld [smem:[#allocation0]]
  $region42: #{tpu_custom_call.1} parent=0
    _
  %s8 = ssub.s32 1, %s6
  %s9 = scalar_select 0, %s8, %s6
  $region1: #{tpu_custom_call.1} parent=0
    #allocation2 [shape = 'u8[16384]{0}', space=vmem, size = 0x4000, scoped, tag = 'input window, operand 0, single buffered']
    #allocation3 [shape = 's32[1]{0}', space=sflag, size = 0x4, scoped, tag = 'scoped memory for tpu_custom_call.1']
    #allocation4 [shape = 's32[1]{0}', space=sflag, size = 0x4, scoped, tag = 'scoped memory for tpu_custom_call.1']
    #allocation5 [shape = 'u8[524288]{0}', space=vmem, size = 0x80000, scoped, tag = 'input window, operand 1, single buffered']
    #allocation6 [shape = 's32[1]{0}', space=sflag, size = 0x4, scoped, tag = 'scoped memory for tpu_custom_call.1']
    #allocation7 [shape = 'u8[131072]{0}', space=vmem, size = 0x20000, scoped, tag = 'input window, operand 3, single buffered']
    #allocation8 [shape = 'u8[4096]{0}', space=vmem, size = 0x1000, scoped, tag = 'output window, operand 0, single buffered']
    %10 = vsyncpa [#allocation3], 0
    %11 = vsyncpa [#allocation6], 0
    %12 = vsyncpa [#allocation4], 0
    // Predicated region
    $region2: #{tpu_custom_call.1} parent=1 // pred_check
      _
    $region3: #{tpu_custom_call.1} parent=1 // pred_check_branch
      %14 = sbr.rel (0) target = $region5
    $region4: #{tpu_custom_call.1} parent=1 // pred_region
      %s16 = ssub.s32 512, 512
      %17 = vsyncadd [#allocation3], %s16
      %s19 = sshll.u32 [#allocation2], 4
      %s20 = int_to_ptr.vmem [resolvable:$true] %s19
      %22 = dma.hbm_to_vmem [thread:$0]  %s0, 512, %s20, [#allocation3]
    $region5: #{tpu_custom_call.1} parent=1 // pred_fallthru
      _
    // Predicated region
    $region6: #{tpu_custom_call.1} parent=1 // pred_check
      _
    $region7: #{tpu_custom_call.1} parent=1 // pred_check_branch
      %24 = sbr.rel (0) target = $region9
    $region8: #{tpu_custom_call.1} parent=1 // pred_region
      %s26 = ssub.s32 16384, 16384
      %27 = vsyncadd [#allocation6], %s26
      %s28 = sshll.u32 [#allocation5], 4
      %s29 = int_to_ptr.vmem [resolvable:$true] %s28
      %34 = dma.hbm_to_vmem [thread:$0]  %s1, 16384, %s29, [#allocation6], 256, 256, 16
    $region9: #{tpu_custom_call.1} parent=1 // pred_fallthru
      _
    // Predicated region
    $region10: #{tpu_custom_call.1} parent=1 // pred_check
      _
    $region11: #{tpu_custom_call.1} parent=1 // pred_check_branch
      %36 = sbr.rel (0) target = $region13
    $region12: #{tpu_custom_call.1} parent=1 // pred_region
      _
    $region13: #{tpu_custom_call.1} parent=1 // pred_fallthru
      _
    // Predicated region
    $region14: #{tpu_custom_call.1} parent=1 // pred_check
      _
    $region15: #{tpu_custom_call.1} parent=1 // pred_check_branch
      %38 = sbr.rel (0) target = $region17
    $region16: #{tpu_custom_call.1} parent=1 // pred_region
      %s40 = ssub.s32 4096, 4096
      %41 = vsyncadd [#allocation6], %s40
      %s42 = sshll.u32 [#allocation7], 4
      %s43 = int_to_ptr.vmem [resolvable:$true] %s42
      %48 = dma.hbm_to_vmem [thread:$0]  %s3, 4096, %s43, [#allocation6], 128, 128, 8
    $region17: #{tpu_custom_call.1} parent=1 // pred_fallthru
      _
    // Predicated region
    $region18: #{tpu_custom_call.1} parent=1 // pred_check
      _
    $region19: #{tpu_custom_call.1} parent=1 // pred_check_branch
      %50 = sbr.rel (0) target = $region21
    $region20: #{tpu_custom_call.1} parent=1 // pred_region
      _
    $region21: #{tpu_custom_call.1} parent=1 // pred_fallthru
      _
    // Predicated region
    $region22: #{tpu_custom_call.1} parent=1 // pred_check
      _
    $region23: #{tpu_custom_call.1} parent=1 // pred_check_branch
      %52 = sbr.rel (0) target = $region25
    $region24: #{tpu_custom_call.1} parent=1 // pred_region
      %53 = dma.done [#allocation3], 512
    $region25: #{tpu_custom_call.1} parent=1 // pred_fallthru
      _
    // Predicated region
    $region26: #{tpu_custom_call.1} parent=1 // pred_check
      _
    $region27: #{tpu_custom_call.1} parent=1 // pred_check_branch
      %55 = sbr.rel (0) target = $region29
    $region28: #{tpu_custom_call.1} parent=1 // pred_region
      %56 = dma.done [#allocation6], 16384
    $region29: #{tpu_custom_call.1} parent=1 // pred_fallthru
      _
    // Predicated region
    $region30: #{tpu_custom_call.1} parent=1 // pred_check
      _
    $region31: #{tpu_custom_call.1} parent=1 // pred_check_branch
      %58 = sbr.rel (0) target = $region33
    $region32: #{tpu_custom_call.1} parent=1 // pred_region
      %59 = dma.done [#allocation6], 4096
    $region33: #{tpu_custom_call.1} parent=1 // pred_fallthru
      _
    %v60 = vld [vmem:[#allocation2] sm:$0xff]
    %v61 = vld [vmem:[#allocation2 + $0x8] sm:$0xff]
    %v62 = vld [vmem:[#allocation2 + $0x10] sm:$0xff]
    %v63 = vld [vmem:[#allocation2 + $0x18] sm:$0xff]
    %v64 = vld [vmem:[#allocation5] sm:$0xff]
    %v65 = vld [vmem:[#allocation5 + $0x8] sm:$0xff]
    %v66 = vld [vmem:[#allocation5 + $0x10] sm:$0xff]
    %v67 = vld [vmem:[#allocation5 + $0x18] sm:$0xff]
    %v68 = vld [vmem:[#allocation5 + $0x20] sm:$0xff]
    %v69 = vld [vmem:[#allocation5 + $0x28] sm:$0xff]
    %v70 = vld [vmem:[#allocation5 + $0x30] sm:$0xff]
    %v71 = vld [vmem:[#allocation5 + $0x38] sm:$0xff]
    %v72 = vld [vmem:[#allocation5 + $0x40] sm:$0xff]
    %v73 = vld [vmem:[#allocation5 + $0x48] sm:$0xff]
    %v74 = vld [vmem:[#allocation5 + $0x50] sm:$0xff]
    %v75 = vld [vmem:[#allocation5 + $0x58] sm:$0xff]
    %v76 = vld [vmem:[#allocation5 + $0x60] sm:$0xff]
    %v77 = vld [vmem:[#allocation5 + $0x68] sm:$0xff]
    %v78 = vld [vmem:[#allocation5 + $0x70] sm:$0xff]
    %v79 = vld [vmem:[#allocation5 + $0x78] sm:$0xff]
    %v80 = vld [vmem:[#allocation5 + $0x80] sm:$0xff]
    %v81 = vld [vmem:[#allocation5 + $0x88] sm:$0xff]
    %v82 = vld [vmem:[#allocation5 + $0x90] sm:$0xff]
    %v83 = vld [vmem:[#allocation5 + $0x98] sm:$0xff]
    %v84 = vld [vmem:[#allocation5 + $0xa0] sm:$0xff]
    %v85 = vld [vmem:[#allocation5 + $0xa8] sm:$0xff]
    %v86 = vld [vmem:[#allocation5 + $0xb0] sm:$0xff]
    %v87 = vld [vmem:[#allocation5 + $0xb8] sm:$0xff]
    %v88 = vld [vmem:[#allocation5 + $0xc0] sm:$0xff]
    %v89 = vld [vmem:[#allocation5 + $0xc8] sm:$0xff]
    %v90 = vld [vmem:[#allocation5 + $0xd0] sm:$0xff]
    %v91 = vld [vmem:[#allocation5 + $0xd8] sm:$0xff]
    %v92 = vld [vmem:[#allocation5 + $0xe0] sm:$0xff]
    %v93 = vld [vmem:[#allocation5 + $0xe8] sm:$0xff]
    %v94 = vld [vmem:[#allocation5 + $0xf0] sm:$0xff]
    %v95 = vld [vmem:[#allocation5 + $0xf8] sm:$0xff]
    %v96 = vld [vmem:[#allocation5 + $0x100] sm:$0xff]
    %v97 = vld [vmem:[#allocation5 + $0x108] sm:$0xff]
    %v98 = vld [vmem:[#allocation5 + $0x110] sm:$0xff]
    %v99 = vld [vmem:[#allocation5 + $0x118] sm:$0xff]
    %v100 = vld [vmem:[#allocation5 + $0x120] sm:$0xff]
    %v101 = vld [vmem:[#allocation5 + $0x128] sm:$0xff]
    %v102 = vld [vmem:[#allocation5 + $0x130] sm:$0xff]
    %v103 = vld [vmem:[#allocation5 + $0x138] sm:$0xff]
    %v104 = vld [vmem:[#allocation5 + $0x140] sm:$0xff]
    %v105 = vld [vmem:[#allocation5 + $0x148] sm:$0xff]
    %v106 = vld [vmem:[#allocation5 + $0x150] sm:$0xff]
    %v107 = vld [vmem:[#allocation5 + $0x158] sm:$0xff]
    %v108 = vld [vmem:[#allocation5 + $0x160] sm:$0xff]
    %v109 = vld [vmem:[#allocation5 + $0x168] sm:$0xff]
    %v110 = vld [vmem:[#allocation5 + $0x170] sm:$0xff]
    %v111 = vld [vmem:[#allocation5 + $0x178] sm:$0xff]
    %v112 = vld [vmem:[#allocation5 + $0x180] sm:$0xff]
    %v113 = vld [vmem:[#allocation5 + $0x188] sm:$0xff]
    %v114 = vld [vmem:[#allocation5 + $0x190] sm:$0xff]
    %v115 = vld [vmem:[#allocation5 + $0x198] sm:$0xff]
    %v116 = vld [vmem:[#allocation5 + $0x1a0] sm:$0xff]
    %v117 = vld [vmem:[#allocation5 + $0x1a8] sm:$0xff]
    %v118 = vld [vmem:[#allocation5 + $0x1b0] sm:$0xff]
    %v119 = vld [vmem:[#allocation5 + $0x1b8] sm:$0xff]
    %v120 = vld [vmem:[#allocation5 + $0x1c0] sm:$0xff]
    %v121 = vld [vmem:[#allocation5 + $0x1c8] sm:$0xff]
    %v122 = vld [vmem:[#allocation5 + $0x1d0] sm:$0xff]
    %v123 = vld [vmem:[#allocation5 + $0x1d8] sm:$0xff]
    %v124 = vld [vmem:[#allocation5 + $0x1e0] sm:$0xff]
    %v125 = vld [vmem:[#allocation5 + $0x1e8] sm:$0xff]
    %v126 = vld [vmem:[#allocation5 + $0x1f0] sm:$0xff]
    %v127 = vld [vmem:[#allocation5 + $0x1f8] sm:$0xff]
    %v128 = vld [vmem:[#allocation5 + $0x200] sm:$0xff]
    %v129 = vld [vmem:[#allocation5 + $0x208] sm:$0xff]
    %v130 = vld [vmem:[#allocation5 + $0x210] sm:$0xff]
    %v131 = vld [vmem:[#allocation5 + $0x218] sm:$0xff]
    %v132 = vld [vmem:[#allocation5 + $0x220] sm:$0xff]
    %v133 = vld [vmem:[#allocation5 + $0x228] sm:$0xff]
    %v134 = vld [vmem:[#allocation5 + $0x230] sm:$0xff]
    %v135 = vld [vmem:[#allocation5 + $0x238] sm:$0xff]
    %v136 = vld [vmem:[#allocation5 + $0x240] sm:$0xff]
    %v137 = vld [vmem:[#allocation5 + $0x248] sm:$0xff]
    %v138 = vld [vmem:[#allocation5 + $0x250] sm:$0xff]
    %v139 = vld [vmem:[#allocation5 + $0x258] sm:$0xff]
    %v140 = vld [vmem:[#allocation5 + $0x260] sm:$0xff]
    %v141 = vld [vmem:[#allocation5 + $0x268] sm:$0xff]
    %v142 = vld [vmem:[#allocation5 + $0x270] sm:$0xff]
    %v143 = vld [vmem:[#allocation5 + $0x278] sm:$0xff]
    %v144 = vld [vmem:[#allocation5 + $0x280] sm:$0xff]
    %v145 = vld [vmem:[#allocation5 + $0x288] sm:$0xff]
    %v146 = vld [vmem:[#allocation5 + $0x290] sm:$0xff]
    %v147 = vld [vmem:[#allocation5 + $0x298] sm:$0xff]
    %v148 = vld [vmem:[#allocation5 + $0x2a0] sm:$0xff]
    %v149 = vld [vmem:[#allocation5 + $0x2a8] sm:$0xff]
    %v150 = vld [vmem:[#allocation5 + $0x2b0] sm:$0xff]
    %v151 = vld [vmem:[#allocation5 + $0x2b8] sm:$0xff]
    %v152 = vld [vmem:[#allocation5 + $0x2c0] sm:$0xff]
    %v153 = vld [vmem:[#allocation5 + $0x2c8] sm:$0xff]
    %v154 = vld [vmem:[#allocation5 + $0x2d0] sm:$0xff]
    %v155 = vld [vmem:[#allocation5 + $0x2d8] sm:$0xff]
    %v156 = vld [vmem:[#allocation5 + $0x2e0] sm:$0xff]
    %v157 = vld [vmem:[#allocation5 + $0x2e8] sm:$0xff]
    %v158 = vld [vmem:[#allocation5 + $0x2f0] sm:$0xff]
    %v159 = vld [vmem:[#allocation5 + $0x2f8] sm:$0xff]
    %v160 = vld [vmem:[#allocation5 + $0x300] sm:$0xff]
    %v161 = vld [vmem:[#allocation5 + $0x308] sm:$0xff]
    %v162 = vld [vmem:[#allocation5 + $0x310] sm:$0xff]
    %v163 = vld [vmem:[#allocation5 + $0x318] sm:$0xff]
    %v164 = vld [vmem:[#allocation5 + $0x320] sm:$0xff]
    %v165 = vld [vmem:[#allocation5 + $0x328] sm:$0xff]
    %v166 = vld [vmem:[#allocation5 + $0x330] sm:$0xff]
    %v167 = vld [vmem:[#allocation5 + $0x338] sm:$0xff]
    %v168 = vld [vmem:[#allocation5 + $0x340] sm:$0xff]
    %v169 = vld [vmem:[#allocation5 + $0x348] sm:$0xff]
    %v170 = vld [vmem:[#allocation5 + $0x350] sm:$0xff]
    %v171 = vld [vmem:[#allocation5 + $0x358] sm:$0xff]
    %v172 = vld [vmem:[#allocation5 + $0x360] sm:$0xff]
    %v173 = vld [vmem:[#allocation5 + $0x368] sm:$0xff]
    %v174 = vld [vmem:[#allocation5 + $0x370] sm:$0xff]
    %v175 = vld [vmem:[#allocation5 + $0x378] sm:$0xff]
    %v176 = vld [vmem:[#allocation5 + $0x380] sm:$0xff]
    %v177 = vld [vmem:[#allocation5 + $0x388] sm:$0xff]
    %v178 = vld [vmem:[#allocation5 + $0x390] sm:$0xff]
    %v179 = vld [vmem:[#allocation5 + $0x398] sm:$0xff]
    %v180 = vld [vmem:[#allocation5 + $0x3a0] sm:$0xff]
    %v181 = vld [vmem:[#allocation5 + $0x3a8] sm:$0xff]
    %v182 = vld [vmem:[#allocation5 + $0x3b0] sm:$0xff]
    %v183 = vld [vmem:[#allocation5 + $0x3b8] sm:$0xff]
    %v184 = vld [vmem:[#allocation5 + $0x3c0] sm:$0xff]
    %v185 = vld [vmem:[#allocation5 + $0x3c8] sm:$0xff]
    %v186 = vld [vmem:[#allocation5 + $0x3d0] sm:$0xff]
    %v187 = vld [vmem:[#allocation5 + $0x3d8] sm:$0xff]
    %v188 = vld [vmem:[#allocation5 + $0x3e0] sm:$0xff]
    %v189 = vld [vmem:[#allocation5 + $0x3e8] sm:$0xff]
    %v190 = vld [vmem:[#allocation5 + $0x3f0] sm:$0xff]
    %v191 = vld [vmem:[#allocation5 + $0x3f8] sm:$0xff]
    %v192 = vld [vmem:[%s2] sm:$0x3]
    %v194 = vlaneseq
    %v195 = vshrl.u32 %v194, 7
    %v196 = vsub.s32 0, %v195
    %v197 = vrot.slane %v192, %v196
    %v198 = vlaneseq
    %v199 = vshrl.u32 %v198, 7
    %v200 = vsub.s32 1, %v199
    %v201 = vrot.slane %v192, %v200
    %204 = vmatprep.subr.mxu0 %v65
    %205 = vmatpush1.msra.mxu0 %v64
    %206 = vmatprep.subr.mxu0 %v67
    %207 = vmatpush1.msra.mxu0 %v66
    %208 = vmatprep.subr.mxu0 %v69
    %209 = vmatpush1.msra.mxu0 %v68
    %210 = vmatprep.subr.mxu0 %v71
    %211 = vmatpush1.msra.mxu0 %v70
    %212 = vmatprep.subr.mxu0 %v73
    %213 = vmatpush1.msra.mxu0 %v72
    %214 = vmatprep.subr.mxu0 %v75
    %215 = vmatpush1.msra.mxu0 %v74
    %216 = vmatprep.subr.mxu0 %v77
    %217 = vmatpush1.msra.mxu0 %v76
    %218 = vmatprep.subr.mxu0 %v79
    %219 = vmatpush1.msra.mxu0 %v78
    %220 = vmatprep.subr.mxu0 %v81
    %221 = vmatpush1.msra.mxu0 %v80
    %222 = vmatprep.subr.mxu0 %v83
    %223 = vmatpush1.msra.mxu0 %v82
    %224 = vmatprep.subr.mxu0 %v85
    %225 = vmatpush1.msra.mxu0 %v84
    %226 = vmatprep.subr.mxu0 %v87
    %227 = vmatpush1.msra.mxu0 %v86
    %228 = vmatprep.subr.mxu0 %v89
    %229 = vmatpush1.msra.mxu0 %v88
    %230 = vmatprep.subr.mxu0 %v91
    %231 = vmatpush1.msra.mxu0 %v90
    %232 = vmatprep.subr.mxu0 %v93
    %233 = vmatpush1.msra.mxu0 %v92
    %234 = vmatprep.subr.mxu0 %v95
    %235 = vmatpush1.msra.mxu0 %v94
    %236 = vmatprep.subr.mxu0 %v97
    %237 = vmatpush1.msra.mxu0 %v96
    %238 = vmatprep.subr.mxu0 %v99
    %239 = vmatpush1.msra.mxu0 %v98
    %240 = vmatprep.subr.mxu0 %v101
    %241 = vmatpush1.msra.mxu0 %v100
    %242 = vmatprep.subr.mxu0 %v103
    %243 = vmatpush1.msra.mxu0 %v102
    %244 = vmatprep.subr.mxu0 %v105
    %245 = vmatpush1.msra.mxu0 %v104
    %246 = vmatprep.subr.mxu0 %v107
    %247 = vmatpush1.msra.mxu0 %v106
    %248 = vmatprep.subr.mxu0 %v109
    %249 = vmatpush1.msra.mxu0 %v108
    %250 = vmatprep.subr.mxu0 %v111
    %251 = vmatpush1.msra.mxu0 %v110
    %252 = vmatprep.subr.mxu0 %v113
    %253 = vmatpush1.msra.mxu0 %v112
    %254 = vmatprep.subr.mxu0 %v115
    %255 = vmatpush1.msra.mxu0 %v114
    %256 = vmatprep.subr.mxu0 %v117
    %257 = vmatpush1.msra.mxu0 %v116
    %258 = vmatprep.subr.mxu0 %v119
    %259 = vmatpush1.msra.mxu0 %v118
    %260 = vmatprep.subr.mxu0 %v121
    %261 = vmatpush1.msra.mxu0 %v120
    %262 = vmatprep.subr.mxu0 %v123
    %263 = vmatpush1.msra.mxu0 %v122
    %264 = vmatprep.subr.mxu0 %v125
    %265 = vmatpush1.msra.mxu0 %v124
    %266 = vmatprep.subr.mxu0 %v127
    %267 = vmatpush1.msra.mxu0 %v126
    %268 = vmatprep.mubr.f32.mxu0 %v61
    %269 = vmatmul.mubr.f32.gmra.mrb[0].mxu0 %v60
    %v270 = vpop.f32.mrb[0].mxu0
    %v271 = vadd.f32 %v197, %v270
    %v272 = vpop.f32.mrb[0].mxu0
    %v273 = vadd.f32 %v201, %v272
    %274 = vdwg.mxu0
    %275 = vmatprep.subr.mxu0 %v129
    %276 = vmatpush1.msra.mxu0 %v128
    %277 = vmatprep.subr.mxu0 %v131
    %278 = vmatpush1.msra.mxu0 %v130
    %279 = vmatprep.subr.mxu0 %v133
    %280 = vmatpush1.msra.mxu0 %v132
    %281 = vmatprep.subr.mxu0 %v135
    %282 = vmatpush1.msra.mxu0 %v134
    %283 = vmatprep.subr.mxu0 %v137
    %284 = vmatpush1.msra.mxu0 %v136
    %285 = vmatprep.subr.mxu0 %v139
    %286 = vmatpush1.msra.mxu0 %v138
    %287 = vmatprep.subr.mxu0 %v141
    %288 = vmatpush1.msra.mxu0 %v140
    %289 = vmatprep.subr.mxu0 %v143
    %290 = vmatpush1.msra.mxu0 %v142
    %291 = vmatprep.subr.mxu0 %v145
    %292 = vmatpush1.msra.mxu0 %v144
    %293 = vmatprep.subr.mxu0 %v147
    %294 = vmatpush1.msra.mxu0 %v146
    %295 = vmatprep.subr.mxu0 %v149
    %296 = vmatpush1.msra.mxu0 %v148
    %297 = vmatprep.subr.mxu0 %v151
    %298 = vmatpush1.msra.mxu0 %v150
    %299 = vmatprep.subr.mxu0 %v153
    %300 = vmatpush1.msra.mxu0 %v152
    %301 = vmatprep.subr.mxu0 %v155
    %302 = vmatpush1.msra.mxu0 %v154
    %303 = vmatprep.subr.mxu0 %v157
    %304 = vmatpush1.msra.mxu0 %v156
    %305 = vmatprep.subr.mxu0 %v159
    %306 = vmatpush1.msra.mxu0 %v158
    %307 = vmatprep.subr.mxu0 %v161
    %308 = vmatpush1.msra.mxu0 %v160
    %309 = vmatprep.subr.mxu0 %v163
    %310 = vmatpush1.msra.mxu0 %v162
    %311 = vmatprep.subr.mxu0 %v165
    %312 = vmatpush1.msra.mxu0 %v164
    %313 = vmatprep.subr.mxu0 %v167
    %314 = vmatpush1.msra.mxu0 %v166
    %315 = vmatprep.subr.mxu0 %v169
    %316 = vmatpush1.msra.mxu0 %v168
    %317 = vmatprep.subr.mxu0 %v171
    %318 = vmatpush1.msra.mxu0 %v170
    %319 = vmatprep.subr.mxu0 %v173
    %320 = vmatpush1.msra.mxu0 %v172
    %321 = vmatprep.subr.mxu0 %v175
    %322 = vmatpush1.msra.mxu0 %v174
    %323 = vmatprep.subr.mxu0 %v177
    %324 = vmatpush1.msra.mxu0 %v176
    %325 = vmatprep.subr.mxu0 %v179
    %326 = vmatpush1.msra.mxu0 %v178
    %327 = vmatprep.subr.mxu0 %v181
    %328 = vmatpush1.msra.mxu0 %v180
    %329 = vmatprep.subr.mxu0 %v183
    %330 = vmatpush1.msra.mxu0 %v182
    %331 = vmatprep.subr.mxu0 %v185
    %332 = vmatpush1.msra.mxu0 %v184
    %333 = vmatprep.subr.mxu0 %v187
    %334 = vmatpush1.msra.mxu0 %v186
    %335 = vmatprep.subr.mxu0 %v189
    %336 = vmatpush1.msra.mxu0 %v188
    %337 = vmatprep.subr.mxu0 %v191
    %338 = vmatpush1.msra.mxu0 %v190
    %339 = vmatprep.mubr.f32.mxu0 %v63
    %340 = vmatmul.mubr.f32.gmra.mrb[0].mxu0 %v62
    %v341 = vpop.f32.mrb[0].mxu0
    %v342 = vadd.f32 %v271, %v341
    %v343 = vpop.f32.mrb[0].mxu0
    %v344 = vadd.f32 %v273, %v343
    %345 = vdwg.mxu0
    %v346 = vmax.f32 %v342, 0.0
    %v347 = vmax.f32 %v344, 0.0
    %v348 = vld [vmem:[#allocation7] sm:$0xff]
    %v349 = vld [vmem:[#allocation7 + $0x8] sm:$0xff]
    %v350 = vld [vmem:[#allocation7 + $0x10] sm:$0xff]
    %v351 = vld [vmem:[#allocation7 + $0x18] sm:$0xff]
    %v352 = vld [vmem:[#allocation7 + $0x20] sm:$0xff]
    %v353 = vld [vmem:[#allocation7 + $0x28] sm:$0xff]
    %v354 = vld [vmem:[#allocation7 + $0x30] sm:$0xff]
    %v355 = vld [vmem:[#allocation7 + $0x38] sm:$0xff]
    %v356 = vld [vmem:[#allocation7 + $0x40] sm:$0xff]
    %v357 = vld [vmem:[#allocation7 + $0x48] sm:$0xff]
    %v358 = vld [vmem:[#allocation7 + $0x50] sm:$0xff]
    %v359 = vld [vmem:[#allocation7 + $0x58] sm:$0xff]
    %v360 = vld [vmem:[#allocation7 + $0x60] sm:$0xff]
    %v361 = vld [vmem:[#allocation7 + $0x68] sm:$0xff]
    %v362 = vld [vmem:[#allocation7 + $0x70] sm:$0xff]
    %v363 = vld [vmem:[#allocation7 + $0x78] sm:$0xff]
    %v364 = vld [vmem:[#allocation7 + $0x80] sm:$0xff]
    %v365 = vld [vmem:[#allocation7 + $0x88] sm:$0xff]
    %v366 = vld [vmem:[#allocation7 + $0x90] sm:$0xff]
    %v367 = vld [vmem:[#allocation7 + $0x98] sm:$0xff]
    %v368 = vld [vmem:[#allocation7 + $0xa0] sm:$0xff]
    %v369 = vld [vmem:[#allocation7 + $0xa8] sm:$0xff]
    %v370 = vld [vmem:[#allocation7 + $0xb0] sm:$0xff]
    %v371 = vld [vmem:[#allocation7 + $0xb8] sm:$0xff]
    %v372 = vld [vmem:[#allocation7 + $0xc0] sm:$0xff]
    %v373 = vld [vmem:[#allocation7 + $0xc8] sm:$0xff]
    %v374 = vld [vmem:[#allocation7 + $0xd0] sm:$0xff]
    %v375 = vld [vmem:[#allocation7 + $0xd8] sm:$0xff]
    %v376 = vld [vmem:[#allocation7 + $0xe0] sm:$0xff]
    %v377 = vld [vmem:[#allocation7 + $0xe8] sm:$0xff]
    %v378 = vld [vmem:[#allocation7 + $0xf0] sm:$0xff]
    %v379 = vld [vmem:[#allocation7 + $0xf8] sm:$0xff]
    %v380 = vld [vmem:[%s4] sm:$0x1]
    %v382 = vlaneseq
    %v383 = vshrl.u32 %v382, 7
    %v384 = vsub.s32 0, %v383
    %v385 = vrot.slane %v380, %v384
    %387 = vmatprep.subr.mxu0 0.0
    %388 = vmatpush1.msra.mxu0 %v348
    %389 = vmatprep.subr.mxu0 0.0
    %390 = vmatpush1.msra.mxu0 %v349
    %391 = vmatprep.subr.mxu0 0.0
    %392 = vmatpush1.msra.mxu0 %v350
    %393 = vmatprep.subr.mxu0 0.0
    %394 = vmatpush1.msra.mxu0 %v351
    %395 = vmatprep.subr.mxu0 0.0
    %396 = vmatpush1.msra.mxu0 %v352
    %397 = vmatprep.subr.mxu0 0.0
    %398 = vmatpush1.msra.mxu0 %v353
    %399 = vmatprep.subr.mxu0 0.0
    %400 = vmatpush1.msra.mxu0 %v354
    %401 = vmatprep.subr.mxu0 0.0
    %402 = vmatpush1.msra.mxu0 %v355
    %403 = vmatprep.subr.mxu0 0.0
    %404 = vmatpush1.msra.mxu0 %v356
    %405 = vmatprep.subr.mxu0 0.0
    %406 = vmatpush1.msra.mxu0 %v357
    %407 = vmatprep.subr.mxu0 0.0
    %408 = vmatpush1.msra.mxu0 %v358
    %409 = vmatprep.subr.mxu0 0.0
    %410 = vmatpush1.msra.mxu0 %v359
    %411 = vmatprep.subr.mxu0 0.0
    %412 = vmatpush1.msra.mxu0 %v360
    %413 = vmatprep.subr.mxu0 0.0
    %414 = vmatpush1.msra.mxu0 %v361
    %415 = vmatprep.subr.mxu0 0.0
    %416 = vmatpush1.msra.mxu0 %v362
    %417 = vmatprep.subr.mxu0 0.0
    %418 = vmatpush1.msra.mxu0 %v363
    %419 = vmatprep.subr.mxu0 0.0
    %420 = vmatpush1.msra.mxu0 %v364
    %421 = vmatprep.subr.mxu0 0.0
    %422 = vmatpush1.msra.mxu0 %v365
    %423 = vmatprep.subr.mxu0 0.0
    %424 = vmatpush1.msra.mxu0 %v366
    %425 = vmatprep.subr.mxu0 0.0
    %426 = vmatpush1.msra.mxu0 %v367
    %427 = vmatprep.subr.mxu0 0.0
    %428 = vmatpush1.msra.mxu0 %v368
    %429 = vmatprep.subr.mxu0 0.0
    %430 = vmatpush1.msra.mxu0 %v369
    %431 = vmatprep.subr.mxu0 0.0
    %432 = vmatpush1.msra.mxu0 %v370
    %433 = vmatprep.subr.mxu0 0.0
    %434 = vmatpush1.msra.mxu0 %v371
    %435 = vmatprep.subr.mxu0 0.0
    %436 = vmatpush1.msra.mxu0 %v372
    %437 = vmatprep.subr.mxu0 0.0
    %438 = vmatpush1.msra.mxu0 %v373
    %439 = vmatprep.subr.mxu0 0.0
    %440 = vmatpush1.msra.mxu0 %v374
    %441 = vmatprep.subr.mxu0 0.0
    %442 = vmatpush1.msra.mxu0 %v375
    %443 = vmatprep.subr.mxu0 0.0
    %444 = vmatpush1.msra.mxu0 %v376
    %445 = vmatprep.subr.mxu0 0.0
    %446 = vmatpush1.msra.mxu0 %v377
    %447 = vmatprep.subr.mxu0 0.0
    %448 = vmatpush1.msra.mxu0 %v378
    %449 = vmatprep.subr.mxu0 0.0
    %450 = vmatpush1.msra.mxu0 %v379
    %451 = vmatprep.mubr.f32.mxu0 %v347
    %452 = vmatmul.mubr.f32.gmra.mrb[0].mxu0 %v346
    %v453 = vpop.f32.mrb[0].mxu0
    %v454 = vadd.f32 %v385, %v453
    %v455 = vpop.f32.mrb[0].mxu0
    %456 = vdwg.mxu0
    %457 = vst [vmem:[#allocation8] sm:$0xff] %v454
    // Predicated region
    $region34: #{tpu_custom_call.1} parent=1 // pred_check
      _
    $region35: #{tpu_custom_call.1} parent=1 // pred_check_branch
      %459 = sbr.rel (0) target = $region37
    $region36: #{tpu_custom_call.1} parent=1 // pred_region
      %s461 = ssub.s32 128, 128
      %462 = vsyncadd [#allocation4], %s461
      %s464 = sshll.u32 [#allocation8], 4
      %s465 = int_to_ptr.vmem [resolvable:$true] %s464
      %467 = dma.vmem_to_hbm [thread:$0]  %s465, 128, %s5, [#allocation4]
    $region37: #{tpu_custom_call.1} parent=1 // pred_fallthru
      _
    // Predicated region
    $region38: #{tpu_custom_call.1} parent=1 // pred_check
      _
    $region39: #{tpu_custom_call.1} parent=1 // pred_check_branch
      %469 = sbr.rel (0) target = $region41
    $region40: #{tpu_custom_call.1} parent=1 // pred_region
      %470 = dma.done [#allocation4], 128
    $region41: #{tpu_custom_call.1} parent=1 // pred_fallthru
      _
    %471 = vsyncpa [#allocation3], 1
    %472 = vsyncpa [#allocation6], 1
    %473 = vsyncpa [#allocation4], 1

</llo_original>
